<compile_context>
chip_gen: v7x
topology: tpu7x:2x2x1
jax: 0.10.0
libtpu: 0.0.40
codegen_flags: <defaults>
</compile_context>

<pallas_src>
import jax
import jax.numpy as jnp
from jax.experimental import pallas as pl
from jax.experimental.pallas import tpu as pltpu


def _round_up(x, m):
    return (x + m - 1) // m * m


def _sublane_align(dtype):
    itemsize = jnp.dtype(dtype).itemsize
    if itemsize >= 4:
        return 8
    if itemsize == 2:
        return 16
    return 32


def _pick_tile(dim, align, cap):
    """Largest divisor of `dim` that is a multiple of `align` and <= cap.

    `dim` is already a multiple of `align`, so `align` always qualifies.
    Picking a divisor (instead of padding `dim` up to a tile multiple) avoids
    any padding beyond the minimal sublane/lane alignment.
    """
    cap = max(align, min(cap, dim))
    cand = cap - cap % align
    while cand >= align:
        if dim % cand == 0:
            return cand
        cand -= align
    return align


def _fc_kernel_direct(x_ref, w_ref, b_ref, o_ref):
    # f32 output: accumulate straight into the resident output block.
    # x_ref: (e_blk, tm, tk)  w_ref: (e_blk, tk, tn)  b_ref: (e_blk, 1, tn)
    k = pl.program_id(3)

    @pl.when(k == 0)
    def _init():
        o_ref[...] = jnp.broadcast_to(
            b_ref[...].astype(o_ref.dtype), o_ref.shape)

    o_ref[...] += jnp.einsum(
        "emk,ekn->emn", x_ref[...], w_ref[...],
        preferred_element_type=jnp.float32)


def _fc_kernel_scratch(x_ref, w_ref, b_ref, o_ref, acc_ref):
    # Low-precision output: accumulate in f32 scratch, cast once at the end.
    k = pl.program_id(3)

    @pl.when(k == 0)
    def _init():
        acc_ref[...] = jnp.broadcast_to(
            b_ref[...].astype(jnp.float32), acc_ref.shape)

    acc_ref[...] += jnp.einsum(
        "emk,ekn->emn", x_ref[...], w_ref[...],
        preferred_element_type=jnp.float32)

    @pl.when(k == pl.num_programs(3) - 1)
    def _finalize():
        o_ref[...] = acc_ref[...].astype(o_ref.dtype)


def ensemble_fc(x, weight, bias, *, use_bf16=False,
                tm_max=512, tn_max=512, tk_max=1024,
                fold_budget_bytes=16 * 1024 * 1024):
    """x: (E, B, In), weight: (E, In, Out), bias: (E, Out) -> (E, B, Out)."""
    E, B, In = x.shape
    assert weight.shape[0] == E and weight.shape[1] == In
    Out = weight.shape[2]
    assert bias.shape == (E, Out)

    out_dtype = x.dtype
    compute_dtype = jnp.bfloat16 if use_bf16 else x.dtype
    if jnp.dtype(compute_dtype) != jnp.dtype(x.dtype):
        # For production callers, pre-cast (and pre-pad) weights once outside
        # the hot path to avoid an extra HBM pass over the largest operand.
        x = x.astype(compute_dtype)
        weight = weight.astype(compute_dtype)

    use_scratch = jnp.dtype(out_dtype) != jnp.dtype(jnp.float32)

    # Minimal alignment: sublanes on B (8 for f32, 16 for bf16), lanes on In/Out.
    sub_align = max(_sublane_align(compute_dtype), _sublane_align(out_dtype))
    Bp = _round_up(B, sub_align)
    Inp = _round_up(In, 128)
    Outp = _round_up(Out, 128)

    # Tiles are divisors of the aligned dims -> zero tile-multiple padding.
    tm = _pick_tile(Bp, sub_align, tm_max)
    tk = _pick_tile(Inp, 128, tk_max)
    tn = _pick_tile(Outp, 128, tn_max)

    # Pad only if the dims are not already aligned (zero padding on the
    # reduction axis is exact; padded output rows/cols are sliced off).
    if (Bp, Inp) != (B, In):
        x = jnp.pad(x, ((0, 0), (0, Bp - B), (0, Inp - In)))
    if (Inp, Outp) != (In, Out):
        weight = jnp.pad(weight, ((0, 0), (0, Inp - In), (0, Outp - Out)))
    bias3 = bias.reshape(E, 1, Out)
    if Outp != Out:
        bias3 = jnp.pad(bias3, ((0, 0), (0, 0), (0, Outp - Out)))

    # Ensemble folding: amortize the ~0.35us/grid-step overhead on tiny
    # per-member tiles.  Budget counts double-buffering and real itemsizes,
    # and keeps >=2 parallel grid steps so both v7x TensorCores get work.
    in_bytes = jnp.dtype(compute_dtype).itemsize
    out_bytes = jnp.dtype(out_dtype).itemsize
    bias_bytes = jnp.dtype(bias3.dtype).itemsize
    bytes_per_member = (2 * tm * tk * in_bytes        # x (double-buffered)
                        + 2 * tk * tn * in_bytes      # weight (double-buffered)
                        + 2 * tn * bias_bytes         # bias (double-buffered)
                        + 2 * tm * tn * out_bytes     # output (double-buffered)
                        + (tm * tn * 4 if use_scratch else 0))

    other_parallel = (Bp // tm) * (Outp // tn)
    max_fold = E
    if E >= 2 and other_parallel < 2:
        max_fold = E // 2
    e_blk = 1
    for cand in range(max_fold, 0, -1):
        if E % cand == 0 and cand * bytes_per_member <= fold_budget_bytes:
            e_blk = cand
            break

    grid = (E // e_blk, Bp // tm, Outp // tn, Inp // tk)

    kernel = _fc_kernel_scratch if use_scratch else _fc_kernel_direct
    scratch_shapes = ([pltpu.VMEM((e_blk, tm, tn), jnp.float32)]
                      if use_scratch else [])

    grid_spec = pltpu.PrefetchScalarGridSpec(
        num_scalar_prefetch=0,
        grid=grid,
        in_specs=[
            pl.BlockSpec((e_blk, tm, tk), lambda e, i, j, k: (e, i, k)),
            pl.BlockSpec((e_blk, tk, tn), lambda e, i, j, k: (e, k, j)),
            pl.BlockSpec((e_blk, 1, tn), lambda e, i, j, k: (e, 0, j)),
        ],
        out_specs=pl.BlockSpec((e_blk, tm, tn), lambda e, i, j, k: (e, i, j)),
        scratch_shapes=scratch_shapes,
    )

    out_padded = pl.pallas_call(
        kernel,
        out_shape=jax.ShapeDtypeStruct((E, Bp, Outp), out_dtype),
        grid_spec=grid_spec,
        compiler_params=pltpu.CompilerParams(
            dimension_semantics=("parallel", "parallel", "parallel",
                                 "arbitrary"),
            vmem_limit_bytes=32 * 1024 * 1024,
        ),
    )(x, weight, bias3)

    if (Bp, Outp) != (B, Out):
        out_padded = out_padded[:, :B, :Out]
    return out_padded


if __name__ == "__main__":
    # Small shapes consistent with the module.
    ensemble_size = 4
    batch = 8
    in_features = 32
    out_features = 32

    key = jax.random.PRNGKey(0)
    kx, kw, kb = jax.random.split(key, 3)

    x = jax.random.normal(kx, (ensemble_size, batch, in_features),
                          dtype=jnp.float32)
    weight = jax.random.normal(kw, (ensemble_size, in_features, out_features),
                               dtype=jnp.float32) * 0.1
    bias = jax.random.normal(kb, (ensemble_size, out_features),
                             dtype=jnp.float32) * 0.1

    out = jax.block_until_ready(ensemble_fc(x, weight, bias))

    # Reference check (plain JAX bmm + bias broadcast).
    ref = jnp.einsum("ebi,eio->ebo", x, weight) + bias[:, None, :]
    assert out.shape == (ensemble_size, batch, out_features)
    assert jnp.allclose(out, ref, atol=1e-5, rtol=1e-5)

    print("KERNEL_OK")
</pallas_src>

<mosaic_0001>
module attributes {stable_mosaic.version = 11 : i64} {
  func.func @_fc_kernel_direct(%arg0: i32, %arg1: i32, %arg2: i32, %arg3: i32, %arg4: memref<2x8x128xf32, #tpu.memory_space<vmem>>, %arg5: memref<2x128x128xf32, #tpu.memory_space<vmem>>, %arg6: memref<2x1x128xf32, #tpu.memory_space<vmem>>, %arg7: memref<2x8x128xf32, #tpu.memory_space<vmem>>) attributes {dimension_semantics = [#tpu.dimension_semantics<parallel>, #tpu.dimension_semantics<parallel>, #tpu.dimension_semantics<parallel>, #tpu.dimension_semantics<arbitrary>], iteration_bounds = array<i64: 2, 1, 1, 1>, scalar_prefetch = 0 : i64, scratch_operands = 0 : i64, tpu.core_type = #tpu.core_type<tc>, window_params = [{transform_indices = @transform_0, window_bounds = array<i64: 2, 8, 128>}, {transform_indices = @transform_1, window_bounds = array<i64: 2, 128, 128>}, {transform_indices = @transform_2, window_bounds = array<i64: 2, 1, 128>}, {transform_indices = @transform_3, window_bounds = array<i64: 2, 8, 128>}]} {
    %c0_i32 = arith.constant 0 : i32
    %0 = arith.cmpi eq, %arg3, %c0_i32 : i32
    %1 = arith.extui %0 : i1 to i32
    %c0_i32_0 = arith.constant 0 : i32
    %2 = arith.cmpi ne, %1, %c0_i32_0 : i32
    scf.if %2 {
      %c0_12 = arith.constant 0 : index
      %c0_13 = arith.constant 0 : index
      %c0_14 = arith.constant 0 : index
      %9 = vector.load %arg6[%c0_12, %c0_13, %c0_14] : memref<2x1x128xf32, #tpu.memory_space<vmem>>, vector<2x1x128xf32>
      %10 = vector.shape_cast %9 : vector<2x1x128xf32> to vector<2x1x128xf32>
      %11 = vector.broadcast %10 : vector<2x1x128xf32> to vector<2x8x128xf32>
      %c0_15 = arith.constant 0 : index
      %c0_16 = arith.constant 0 : index
      %c0_17 = arith.constant 0 : index
      %12 = vector.load %arg7[%c0_15, %c0_16, %c0_17] : memref<2x8x128xf32, #tpu.memory_space<vmem>>, vector<2x8x128xf32>
      tpu.vector_store %arg7[%c0_15, %c0_16, %c0_17], %11 {strides = array<i32>} : memref<2x8x128xf32, #tpu.memory_space<vmem>>, vector<2x8x128xf32>,
    } else {
    }
    %c0 = arith.constant 0 : index
    %c0_1 = arith.constant 0 : index
    %c0_2 = arith.constant 0 : index
    %3 = vector.load %arg7[%c0, %c0_1, %c0_2] : memref<2x8x128xf32, #tpu.memory_space<vmem>>, vector<2x8x128xf32>
    %c0_3 = arith.constant 0 : index
    %c0_4 = arith.constant 0 : index
    %c0_5 = arith.constant 0 : index
    %4 = vector.load %arg4[%c0_3, %c0_4, %c0_5] : memref<2x8x128xf32, #tpu.memory_space<vmem>>, vector<2x8x128xf32>
    %c0_6 = arith.constant 0 : index
    %c0_7 = arith.constant 0 : index
    %c0_8 = arith.constant 0 : index
    %5 = vector.load %arg5[%c0_6, %c0_7, %c0_8] : memref<2x128x128xf32, #tpu.memory_space<vmem>>, vector<2x128x128xf32>
    "tpu.trace_start"() <{level = 10 : i32, message = "emk,ekn->emn"}> : () -> ()
    %cst = arith.constant dense<0.000000e+00> : vector<2x8x128xf32>
    %6 = tpu.matmul %4, %5, %cst {dimension_numbers = #tpu.dot_dimension_numbers<[2], [1], [1], [2], [0, 0, 0, 1, 1, 2], [0], [0]>} : vector<2x8x128xf32>, vector<2x128x128xf32>, vector<2x8x128xf32> -> vector<2x8x128xf32>
    "tpu.trace_stop"() : () -> ()
    %7 = arith.addf %3, %6 : vector<2x8x128xf32>
    %c0_9 = arith.constant 0 : index
    %c0_10 = arith.constant 0 : index
    %c0_11 = arith.constant 0 : index
    %8 = vector.load %arg7[%c0_9, %c0_10, %c0_11] : memref<2x8x128xf32, #tpu.memory_space<vmem>>, vector<2x8x128xf32>
    tpu.vector_store %arg7[%c0_9, %c0_10, %c0_11], %7 {strides = array<i32>} : memref<2x8x128xf32, #tpu.memory_space<vmem>>, vector<2x8x128xf32>,
    return
  }
  func.func @transform_0(%arg0: i32, %arg1: i32, %arg2: i32, %arg3: i32) -> (i32, i32, i32) {
    %c0_i32 = arith.constant 0 : i32
    return %arg0, %arg1, %arg3 : i32, i32, i32
  }
  func.func @transform_1(%arg0: i32, %arg1: i32, %arg2: i32, %arg3: i32) -> (i32, i32, i32) {
    %c0_i32 = arith.constant 0 : i32
    return %arg0, %arg3, %arg2 : i32, i32, i32
  }
  func.func @transform_2(%arg0: i32, %arg1: i32, %arg2: i32, %arg3: i32) -> (i32, i32, i32) {
    %c0_i32 = arith.constant 0 : i32
    %c0_i32_0 = arith.constant 0 : i32
    return %arg0, %c0_i32, %arg2 : i32, i32, i32
  }
  func.func @transform_3(%arg0: i32, %arg1: i32, %arg2: i32, %arg3: i32) -> (i32, i32, i32) {
    %c0_i32 = arith.constant 0 : i32
    return %arg0, %arg1, %arg2 : i32, i32, i32
  }
}

</mosaic_0001>

<llo_original>
// kernel: tpu_custom_call.1
$region0: #{tpu_custom_call.1}
  #allocation0 [shape = 'u32[]', space=smem, size = 0x4, offset = 0x4, fixed_abs, tag = 'smem constant byte address 0x4 - core index']
  #allocation1 [shape = 'u32[144,128]{1,0:T(1,128)}', space=vmem, size = 0x12000, scoped, tag = 'internal scratch']
  %s0 = inlined_call_operand.hbm [shape: f32[4,8,128], index: 0, kind: input, shape index: {}]
  %s1 = inlined_call_operand.hbm [shape: f32[4,128,128], index: 1, kind: input, shape index: {}]
  %s2 = inlined_call_operand.vmem [shape: f32[4,1,128], index: 2, kind: input, shape index: {}]
  %s3 = inlined_call_operand.hbm [shape: f32[4,8,128], index: 3, kind: output, shape index: {}]
  %s4 = sld [smem:[#allocation0]]
  $region57: #{tpu_custom_call.1} parent=0
    _
  %s6 = ssub.s32 1, %s4
  %s7 = scalar_select 0, %s6, %s4
  $region1: #{tpu_custom_call.1} parent=0
    #allocation2 [shape = 'u8[16384]{0}', space=vmem, size = 0x4000, scoped, tag = 'input window, operand 0']
    #allocation3 [shape = 's32[2]{0}', space=sflag, size = 0x8, scoped, tag = 'scoped memory for tpu_custom_call.1']
    #allocation4 [shape = 's32[2]{0}', space=sflag, size = 0x8, scoped, tag = 'scoped memory for tpu_custom_call.1']
    #allocation5 [shape = 'u8[262144]{0}', space=vmem, size = 0x40000, scoped, tag = 'input window, operand 1']
    #allocation6 [shape = 's32[2]{0}', space=sflag, size = 0x8, scoped, tag = 'scoped memory for tpu_custom_call.1']
    #allocation7 [shape = 'u8[16384]{0}', space=vmem, size = 0x4000, scoped, tag = 'output window, operand 0']
    %8 = vsyncpa [#allocation3], 0
    %s9 = scalar_lea.sflag [#allocation3], 1
    %10 = vsyncpa %s9, 0
    %11 = vsyncpa [#allocation6], 0
    %s12 = scalar_lea.sflag [#allocation6], 1
    %13 = vsyncpa %s12, 0
    %14 = vsyncpa [#allocation4], 0
    %s15 = scalar_lea.sflag [#allocation4], 1
    %16 = vsyncpa %s15, 0
    loop: start=0, step=1, limit=4
    $region2: #{tpu_custom_call.1} parent=1 // loop_pre_header
      _
    $region3: #{tpu_custom_call.1} parent=1 // loop_header
      %s18 = sphi 0, %s22
      %p19 = scmp.ge.s32.totalorder %s18, 4
      %s25 = sphi 0, %s51
      %s26 = sphi 0, %s47
      %s27 = sphi 0, %s43
      %s28 = sphi 0, %s39
      %s29 = sphi 0, %s25
      %s30 = sphi 0, %s26
      %s31 = sphi 0, %s27
      %s32 = sphi 0, %s28
      %s33 = sphi 0, %s29
      %s34 = sphi 0, %s30
      %s35 = sphi 0, %s31
      %s36 = sphi 0, %s32
      %s58 = sphi 0, %s60
      %s61 = sphi 0, %s58
      %s62 = sphi 0, %s61
      %s78 = sphi 0, %s62
      %s88 = sphi 0, %s90
      %s91 = sphi 0, %s88
      %s92 = sphi 0, %s91
      %s108 = sphi 0, %s92
      %s116 = sphi 0, %s118
      %s119 = sphi 0, %s116
      %s120 = sphi 0, %s119
      %s136 = sphi 0, %s120
      %s146 = sphi 0, %s148
      %s149 = sphi 0, %s146
      %s150 = sphi 0, %s149
      %s166 = sphi 0, %s150
    $region4: #{tpu_custom_call.1} parent=1 // loop_header_branch
      %21 = sbr.rel (%p19) target = $region8
    $region5: #{tpu_custom_call.1} parent=1 // loop_body
      %s23 = ssub.s32 %s18, 1
      %s24 = ssub.s32 %s18, 2
      %s37 = sadd.s32 1, %s28
      %p38 = scmp.ge.s32.totalorder %s37, 1
      %s39 = scalar_select %p38, 0, %s37
      %s40 = sadd.s32 1, %s27
      %s41 = scalar_select %p38, %s40, %s27
      %p42 = scmp.ge.s32.totalorder %s41, 1
      %s43 = scalar_select %p42, 0, %s41
      %s44 = sadd.s32 1, %s26
      %s45 = scalar_select %p42, %s44, %s26
      %p46 = scmp.ge.s32.totalorder %s45, 1
      %s47 = scalar_select %p46, 0, %s45
      %s48 = sadd.s32 1, %s25
      %s49 = scalar_select %p46, %s48, %s25
      %p50 = scmp.ge.s32.totalorder %s49, 2
      %s51 = scalar_select %p50, 0, %s49
      %s52 = ssub.s32 %s25, %s51
      %s53 = ssub.s32 %s26, %s47
      %s54 = sor.u32 %s52, %s53
      %s55 = ssub.s32 %s28, %s39
      %s56 = sor.u32 %s54, %s55
      %p57 = scmp.eq.s32.totalorder %s56, 0
      %s59 = sadd.s32 %s58, 1
      %s60 = scalar_select %p57, %s58, %s59
      %p63 = pneg %p57
      %p64 = scmp.eq.s32.totalorder %s18, 1
      %p65 = por %p63, %p64
      %p66 = scmp.ne.s32.totalorder %s58, %s61
      %p67 = scmp.eq.s32.totalorder %s18, 0
      %p68 = por %p66, %p67
      %p69 = scmp.ne.s32.totalorder %s58, %s61
      %p70 = scmp.eq.s32.totalorder %s23, 1
      %p71 = por %p69, %p70
      %p72 = scmp.ne.s32.totalorder %s61, %s62
      %p73 = scmp.eq.s32.totalorder %s23, 0
      %p74 = por %p72, %p73
      %p75 = scmp.ne.s32.totalorder %s61, %s62
      %p76 = scmp.eq.s32.totalorder %s24, 1
      %p77 = por %p75, %p76
      %p79 = scmp.ne.s32.totalorder %s62, %s78
      %p80 = scmp.eq.s32.totalorder %s24, 0
      %p81 = por %p79, %p80
      %s82 = ssub.s32 %s25, %s51
      %s83 = ssub.s32 %s28, %s39
      %s84 = sor.u32 %s82, %s83
      %s85 = ssub.s32 %s27, %s43
      %s86 = sor.u32 %s84, %s85
      %p87 = scmp.eq.s32.totalorder %s86, 0
      %s89 = sadd.s32 %s88, 1
      %s90 = scalar_select %p87, %s88, %s89
      %p93 = pneg %p87
      %p94 = scmp.eq.s32.totalorder %s18, 1
      %p95 = por %p93, %p94
      %p96 = scmp.ne.s32.totalorder %s88, %s91
      %p97 = scmp.eq.s32.totalorder %s18, 0
      %p98 = por %p96, %p97
      %p99 = scmp.ne.s32.totalorder %s88, %s91
      %p100 = scmp.eq.s32.totalorder %s23, 1
      %p101 = por %p99, %p100
      %p102 = scmp.ne.s32.totalorder %s91, %s92
      %p103 = scmp.eq.s32.totalorder %s23, 0
      %p104 = por %p102, %p103
      %p105 = scmp.ne.s32.totalorder %s91, %s92
      %p106 = scmp.eq.s32.totalorder %s24, 1
      %p107 = por %p105, %p106
      %p109 = scmp.ne.s32.totalorder %s92, %s108
      %p110 = scmp.eq.s32.totalorder %s24, 0
      %p111 = por %p109, %p110
      %s112 = ssub.s32 %s25, %s51
      %s113 = ssub.s32 %s27, %s43
      %s114 = sor.u32 %s112, %s113
      %p115 = scmp.eq.s32.totalorder %s114, 0
      %s117 = sadd.s32 %s116, 1
      %s118 = scalar_select %p115, %s116, %s117
      %p121 = pneg %p115
      %p122 = scmp.eq.s32.totalorder %s18, 1
      %p123 = por %p121, %p122
      %p124 = scmp.ne.s32.totalorder %s116, %s119
      %p125 = scmp.eq.s32.totalorder %s18, 0
      %p126 = por %p124, %p125
      %p127 = scmp.ne.s32.totalorder %s116, %s119
      %p128 = scmp.eq.s32.totalorder %s23, 1
      %p129 = por %p127, %p128
      %p130 = scmp.ne.s32.totalorder %s119, %s120
      %p131 = scmp.eq.s32.totalorder %s23, 0
      %p132 = por %p130, %p131
      %p133 = scmp.ne.s32.totalorder %s119, %s120
      %p134 = scmp.eq.s32.totalorder %s24, 1
      %p135 = por %p133, %p134
      %p137 = scmp.ne.s32.totalorder %s120, %s136
      %p138 = scmp.eq.s32.totalorder %s24, 0
      %p139 = por %p137, %p138
      %s140 = ssub.s32 %s25, %s51
      %s141 = ssub.s32 %s26, %s47
      %s142 = sor.u32 %s140, %s141
      %s143 = ssub.s32 %s27, %s43
      %s144 = sor.u32 %s142, %s143
      %p145 = scmp.eq.s32.totalorder %s144, 0
      %s147 = sadd.s32 %s146, 1
      %s148 = scalar_select %p145, %s146, %s147
      %p151 = pneg %p145
      %p152 = scmp.eq.s32.totalorder %s18, 1
      %p153 = por %p151, %p152
      %p154 = scmp.ne.s32.totalorder %s146, %s149
      %p155 = scmp.eq.s32.totalorder %s18, 0
      %p156 = por %p154, %p155
      %p157 = scmp.ne.s32.totalorder %s146, %s149
      %p158 = scmp.eq.s32.totalorder %s23, 1
      %p159 = por %p157, %p158
      %p160 = scmp.ne.s32.totalorder %s149, %s150
      %p161 = scmp.eq.s32.totalorder %s23, 0
      %p162 = por %p160, %p161
      %p163 = scmp.ne.s32.totalorder %s149, %s150
      %p164 = scmp.eq.s32.totalorder %s24, 1
      %p165 = por %p163, %p164
      %p167 = scmp.ne.s32.totalorder %s150, %s166
      %p168 = scmp.eq.s32.totalorder %s24, 0
      %p169 = por %p167, %p168
      %p170 = scmp.le.s32.totalorder 1, %s18
      %p171 = scmp.lt.s32.totalorder %s18, 3
      %p172 = pnand %p170, %p171
      %p173 = pneg %p172
      // Predicated region
      $region9: #{tpu_custom_call.1} parent=5 // pred_check
        _
      $region10: #{tpu_custom_call.1} parent=5 // pred_check_branch
        %175 = sbr.rel (%p172) target = $region12
      $region11: #{tpu_custom_call.1} parent=5 // pred_region
        %s176 = ssub.s32 %s18, 1
      $region12: #{tpu_custom_call.1} parent=5 // pred_fallthru
        _
      %p177 = scmp.lt.s32.totalorder %s18, 2
      // Predicated region
      $region13: #{tpu_custom_call.1} parent=5 // pred_check
        %p178 = pneg %p177
      $region14: #{tpu_custom_call.1} parent=5 // pred_check_branch
        %180 = sbr.rel (%p178) target = $region16
      $region15: #{tpu_custom_call.1} parent=5 // pred_region
        // Predicated region
        $region17: #{tpu_custom_call.1} parent=15 // pred_check
          %p181 = pneg %p68
        $region18: #{tpu_custom_call.1} parent=15 // pred_check_branch
          %183 = sbr.rel (%p181) target = $region20
        $region19: #{tpu_custom_call.1} parent=15 // pred_region
          %s184 = sand.u32 %s58, 1
          %s185 = scalar_lea.sflag [#allocation3], %s184
          %s186 = sand.u32 %s58, 1
          %s187 = smul.addr %s186, 16
          %s188 = scalar_lea.vmem [#allocation2], %s187
          %s189 = smul.u32 2, %s25
          %s191 = ssub.s32 256, 256
          %192 = vsyncadd %s185, %s191
          %s193 = sadd.s32 %s28, %s26
          %s194 = sadd.s32 %s193, %s189
          %s195 = smul.addr %s194, 128
          %s196 = scalar_lea.hbm %s0, %s195
          %s197 = sshll.u32 %s188, 4
          %s198 = int_to_ptr.vmem [resolvable:$true] %s197
          %203 = dma.hbm_to_vmem [thread:$0]  %s196, 256, %s198, %s185, 128, 128, 8
        $region20: #{tpu_custom_call.1} parent=15 // pred_fallthru
          _
        // Predicated region
        $region21: #{tpu_custom_call.1} parent=15 // pred_check
          %p204 = pneg %p98
        $region22: #{tpu_custom_call.1} parent=15 // pred_check_branch
          %206 = sbr.rel (%p204) target = $region24
        $region23: #{tpu_custom_call.1} parent=15 // pred_region
          %s207 = sand.u32 %s88, 1
          %s208 = scalar_lea.sflag [#allocation6], %s207
          %s209 = sand.u32 %s88, 1
          %s210 = smul.addr %s209, 256
          %s211 = scalar_lea.vmem [#allocation5], %s210
          %s212 = smul.u32 2, %s25
          %s213 = smul.u32 16, %s28
          %s215 = ssub.s32 4096, 4096
          %216 = vsyncadd %s208, %s215
          %s217 = sadd.s32 %s27, %s213
          %s218 = smul.addr %s212, 16
          %s219 = sadd.s32 %s217, %s218
          %s220 = smul.addr %s219, 128
          %s221 = scalar_lea.hbm %s1, %s220
          %s222 = sshll.u32 %s211, 4
          %s223 = int_to_ptr.vmem [resolvable:$true] %s222
          %228 = dma.hbm_to_vmem [thread:$0]  %s221, 4096, %s223, %s208, 128, 128, 8
        $region24: #{tpu_custom_call.1} parent=15 // pred_fallthru
          _
        // Predicated region
        $region25: #{tpu_custom_call.1} parent=15 // pred_check
          %p229 = pneg %p126
        $region26: #{tpu_custom_call.1} parent=15 // pred_check_branch
          %231 = sbr.rel (%p229) target = $region28
        $region27: #{tpu_custom_call.1} parent=15 // pred_region
          %s232 = smul.u32 2, %s25
          %p233 = scmp.lt.s32.totalorder %s232, 3
          %s234 = scalar_select %p233, %s232, 3
          %p235 = scmp.lt.s32.totalorder %s27, 0
          %s236 = scalar_select %p235, %s27, 0
          %s237 = sadd.s32 %s236, %s234
          %s238 = scalar_lea.vmem %s2, %s237
          %s239 = smul.u32 2, %s25
        $region28: #{tpu_custom_call.1} parent=15 // pred_fallthru
          _
      $region16: #{tpu_custom_call.1} parent=5 // pred_fallthru
        _
      %p240 = scmp.le.s32.totalorder 1, %s18
      %p241 = scmp.lt.s32.totalorder %s18, 3
      %p242 = pnand %p240, %p241
      %p243 = pneg %p242
      // Predicated region
      $region29: #{tpu_custom_call.1} parent=5 // pred_check
        _
      $region30: #{tpu_custom_call.1} parent=5 // pred_check_branch
        %245 = sbr.rel (%p242) target = $region32
      $region31: #{tpu_custom_call.1} parent=5 // pred_region
        %s246 = ssub.s32 %s18, 1
        %s247 = sand.u32 %s61, 1
        %s248 = scalar_lea.sflag [#allocation3], %s247
        %s249 = sand.u32 %s61, 1
        %s250 = smul.addr %s249, 16
        %s251 = scalar_lea.vmem [#allocation2], %s250
        // Predicated region
        $region33: #{tpu_custom_call.1} parent=31 // pred_check
          %p252 = pneg %p74
        $region34: #{tpu_custom_call.1} parent=31 // pred_check_branch
          %254 = sbr.rel (%p252) target = $region36
        $region35: #{tpu_custom_call.1} parent=31 // pred_region
          %255 = dma.done %s248, 256
        $region36: #{tpu_custom_call.1} parent=31 // pred_fallthru
          _
        %s256 = sand.u32 %s91, 1
        %s257 = scalar_lea.sflag [#allocation6], %s256
        %s258 = sand.u32 %s91, 1
        %s259 = smul.addr %s258, 256
        %s260 = scalar_lea.vmem [#allocation5], %s259
        // Predicated region
        $region37: #{tpu_custom_call.1} parent=31 // pred_check
          %p261 = pneg %p104
        $region38: #{tpu_custom_call.1} parent=31 // pred_check_branch
          %263 = sbr.rel (%p261) target = $region40
        $region39: #{tpu_custom_call.1} parent=31 // pred_region
          %264 = dma.done %s257, 4096
        $region40: #{tpu_custom_call.1} parent=31 // pred_fallthru
          _
        %s265 = sand.u32 %s61, 1
        %s266 = scalar_lea.sflag [#allocation3], %s265
        %s267 = sand.u32 %s61, 1
        %s268 = smul.addr %s267, 16
        %s269 = scalar_lea.vmem [#allocation2], %s268
        %p270 = pneg %p74
        %p271 = pneg %p71
        %s272 = sand.u32 %s91, 1
        %s273 = scalar_lea.sflag [#allocation6], %s272
        %s274 = sand.u32 %s91, 1
        %s275 = smul.addr %s274, 256
        %s276 = scalar_lea.vmem [#allocation5], %s275
        %p277 = pneg %p104
        %p278 = pneg %p101
        %s279 = smul.u32 2, %s29
        %p280 = scmp.lt.s32.totalorder %s279, 3
        %s281 = scalar_select %p280, %s279, 3
        %p282 = scmp.lt.s32.totalorder %s31, 0
        %s283 = scalar_select %p282, %s31, 0
        %s284 = sadd.s32 %s283, %s281
        %s285 = scalar_lea.vmem %s2, %s284
        %p286 = pneg %p132
        %p287 = pneg %p129
        %p288 = pneg %p162
        %p289 = pneg %p159
        %s290 = sand.u32 %s149, 1
        %s291 = scalar_lea.sflag [#allocation4], %s290
        %s292 = sand.u32 %s149, 1
        %s293 = smul.addr %s292, 16
        %s294 = scalar_lea.vmem [#allocation7], %s293
        %s295 = smul.u32 2, %s29
        %s296 = smul.u32 2, %s29
        %s297 = smul.u32 16, %s32
        %s298 = smul.u32 2, %s29
        %p299 = scmp.lt.s32.totalorder %s298, 3
        %s300 = scalar_select %p299, %s298, 3
        %p301 = scmp.lt.s32.totalorder %s31, 0
        %s302 = scalar_select %p301, %s31, 0
        %s303 = sadd.s32 %s302, %s300
        %s304 = scalar_lea.vmem %s2, %s303
        %s305 = smul.u32 2, %s29
        %s306 = smul.u32 2, %s29
        %p307 = scmp.eq.s32.totalorder %s32, 0
        // Predicated region
        $region41: #{tpu_custom_call.1} parent=31 // pred_check
          %p308 = pneg %p307
        $region42: #{tpu_custom_call.1} parent=31 // pred_check_branch
          %310 = sbr.rel (%p308) target = $region44
        $region43: #{tpu_custom_call.1} parent=31 // pred_region
          %v311 = vld [vmem:[%s304] sm:$0x1]
          %v312 = vld [vmem:[%s304 + $0x1] sm:$0x1]
          %v315 = vlaneseq
          %v316 = vshrl.u32 %v315, 7
          %v317 = vsub.s32 0, %v316
          %v318 = vrot.slane %v311, %v317
          %v319 = vlaneseq
          %v320 = vshrl.u32 %v319, 7
          %v321 = vsub.s32 0, %v320
          %v322 = vrot.slane %v312, %v321
          %325 = vst [vmem:[%s294] sm:$0xff] %v318
          %326 = vst [vmem:[%s294 + $0x8] sm:$0xff] %v322
        $region44: #{tpu_custom_call.1} parent=31 // pred_fallthru
          _
        %v327 = vld [vmem:[%s294] sm:$0xff]
        %v328 = vld [vmem:[%s294 + $0x8] sm:$0xff]
        %v329 = vld [vmem:[%s251] sm:$0xff]
        %v330 = vld [vmem:[%s251 + $0x8] sm:$0xff]
        %v331 = vld [vmem:[%s260] sm:$0xff]
        %v332 = vld [vmem:[%s260 + $0x8] sm:$0xff]
        %v333 = vld [vmem:[%s260 + $0x10] sm:$0xff]
        %v334 = vld [vmem:[%s260 + $0x18] sm:$0xff]
        %v335 = vld [vmem:[%s260 + $0x20] sm:$0xff]
        %v336 = vld [vmem:[%s260 + $0x28] sm:$0xff]
        %v337 = vld [vmem:[%s260 + $0x30] sm:$0xff]
        %v338 = vld [vmem:[%s260 + $0x38] sm:$0xff]
        %v339 = vld [vmem:[%s260 + $0x40] sm:$0xff]
        %v340 = vld [vmem:[%s260 + $0x48] sm:$0xff]
        %v341 = vld [vmem:[%s260 + $0x50] sm:$0xff]
        %v342 = vld [vmem:[%s260 + $0x58] sm:$0xff]
        %v343 = vld [vmem:[%s260 + $0x60] sm:$0xff]
        %v344 = vld [vmem:[%s260 + $0x68] sm:$0xff]
        %v345 = vld [vmem:[%s260 + $0x70] sm:$0xff]
        %v346 = vld [vmem:[%s260 + $0x78] sm:$0xff]
        %v347 = vld [vmem:[%s260 + $0x80] sm:$0xff]
        %v348 = vld [vmem:[%s260 + $0x88] sm:$0xff]
        %v349 = vld [vmem:[%s260 + $0x90] sm:$0xff]
        %v350 = vld [vmem:[%s260 + $0x98] sm:$0xff]
        %v351 = vld [vmem:[%s260 + $0xa0] sm:$0xff]
        %v352 = vld [vmem:[%s260 + $0xa8] sm:$0xff]
        %v353 = vld [vmem:[%s260 + $0xb0] sm:$0xff]
        %v354 = vld [vmem:[%s260 + $0xb8] sm:$0xff]
        %v355 = vld [vmem:[%s260 + $0xc0] sm:$0xff]
        %v356 = vld [vmem:[%s260 + $0xc8] sm:$0xff]
        %v357 = vld [vmem:[%s260 + $0xd0] sm:$0xff]
        %v358 = vld [vmem:[%s260 + $0xd8] sm:$0xff]
        %v359 = vld [vmem:[%s260 + $0xe0] sm:$0xff]
        %v360 = vld [vmem:[%s260 + $0xe8] sm:$0xff]
        %v361 = vld [vmem:[%s260 + $0xf0] sm:$0xff]
        %v362 = vld [vmem:[%s260 + $0xf8] sm:$0xff]
        %363 = vmatprep.subr.mxu0 0.0
        %364 = vmatpush1.msra.mxu0 %v331
        %365 = vmatprep.subr.mxu0 0.0
        %366 = vmatpush1.msra.mxu0 %v332
        %367 = vmatprep.subr.mxu0 0.0
        %368 = vmatpush1.msra.mxu0 %v333
        %369 = vmatprep.subr.mxu0 0.0
        %370 = vmatpush1.msra.mxu0 %v334
        %371 = vmatprep.subr.mxu0 0.0
        %372 = vmatpush1.msra.mxu0 %v335
        %373 = vmatprep.subr.mxu0 0.0
        %374 = vmatpush1.msra.mxu0 %v336
        %375 = vmatprep.subr.mxu0 0.0
        %376 = vmatpush1.msra.mxu0 %v337
        %377 = vmatprep.subr.mxu0 0.0
        %378 = vmatpush1.msra.mxu0 %v338
        %379 = vmatprep.subr.mxu0 0.0
        %380 = vmatpush1.msra.mxu0 %v339
        %381 = vmatprep.subr.mxu0 0.0
        %382 = vmatpush1.msra.mxu0 %v340
        %383 = vmatprep.subr.mxu0 0.0
        %384 = vmatpush1.msra.mxu0 %v341
        %385 = vmatprep.subr.mxu0 0.0
        %386 = vmatpush1.msra.mxu0 %v342
        %387 = vmatprep.subr.mxu0 0.0
        %388 = vmatpush1.msra.mxu0 %v343
        %389 = vmatprep.subr.mxu0 0.0
        %390 = vmatpush1.msra.mxu0 %v344
        %391 = vmatprep.subr.mxu0 0.0
        %392 = vmatpush1.msra.mxu0 %v345
        %393 = vmatprep.subr.mxu0 0.0
        %394 = vmatpush1.msra.mxu0 %v346
        %395 = vmatprep.subr.mxu0 0.0
        %396 = vmatpush1.msra.mxu0 0.0
        %397 = vmatprep.subr.mxu0 0.0
        %398 = vmatpush1.msra.mxu0 0.0
        %399 = vmatprep.subr.mxu0 0.0
        %400 = vmatpush1.msra.mxu0 0.0
        %401 = vmatprep.subr.mxu0 0.0
        %402 = vmatpush1.msra.mxu0 0.0
        %403 = vmatprep.subr.mxu0 0.0
        %404 = vmatpush1.msra.mxu0 0.0
        %405 = vmatprep.subr.mxu0 0.0
        %406 = vmatpush1.msra.mxu0 0.0
        %407 = vmatprep.subr.mxu0 0.0
        %408 = vmatpush1.msra.mxu0 0.0
        %409 = vmatprep.subr.mxu0 0.0
        %410 = vmatpush1.msra.mxu0 0.0
        %411 = vmatprep.subr.mxu0 0.0
        %412 = vmatpush1.msra.mxu0 0.0
        %413 = vmatprep.subr.mxu0 0.0
        %414 = vmatpush1.msra.mxu0 0.0
        %415 = vmatprep.subr.mxu0 0.0
        %416 = vmatpush1.msra.mxu0 0.0
        %417 = vmatprep.subr.mxu0 0.0
        %418 = vmatpush1.msra.mxu0 0.0
        %419 = vmatprep.subr.mxu0 0.0
        %420 = vmatpush1.msra.mxu0 0.0
        %421 = vmatprep.subr.mxu0 0.0
        %422 = vmatpush1.msra.mxu0 0.0
        %423 = vmatprep.subr.mxu0 0.0
        %424 = vmatpush1.msra.mxu0 0.0
        %425 = vmatprep.subr.mxu0 0.0
        %426 = vmatpush1.msra.mxu0 0.0
        %427 = vmatprep.mubr.f32.mxu0 0.0
        %428 = vmatmul.mubr.f32.gmra.mrb[0].mxu0 %v329
        %v429 = vpop.f32.mrb[0].mxu0
        %v430 = vadd.f32 0.0, %v429
        %v431 = vpop.f32.mrb[0].mxu0
        %432 = vdwg.mxu0
        %433 = vmatprep.subr.mxu0 0.0
        %434 = vmatpush1.msra.mxu0 %v347
        %435 = vmatprep.subr.mxu0 0.0
        %436 = vmatpush1.msra.mxu0 %v348
        %437 = vmatprep.subr.mxu0 0.0
        %438 = vmatpush1.msra.mxu0 %v349
        %439 = vmatprep.subr.mxu0 0.0
        %440 = vmatpush1.msra.mxu0 %v350
        %441 = vmatprep.subr.mxu0 0.0
        %442 = vmatpush1.msra.mxu0 %v351
        %443 = vmatprep.subr.mxu0 0.0
        %444 = vmatpush1.msra.mxu0 %v352
        %445 = vmatprep.subr.mxu0 0.0
        %446 = vmatpush1.msra.mxu0 %v353
        %447 = vmatprep.subr.mxu0 0.0
        %448 = vmatpush1.msra.mxu0 %v354
        %449 = vmatprep.subr.mxu0 0.0
        %450 = vmatpush1.msra.mxu0 %v355
        %451 = vmatprep.subr.mxu0 0.0
        %452 = vmatpush1.msra.mxu0 %v356
        %453 = vmatprep.subr.mxu0 0.0
        %454 = vmatpush1.msra.mxu0 %v357
        %455 = vmatprep.subr.mxu0 0.0
        %456 = vmatpush1.msra.mxu0 %v358
        %457 = vmatprep.subr.mxu0 0.0
        %458 = vmatpush1.msra.mxu0 %v359
        %459 = vmatprep.subr.mxu0 0.0
        %460 = vmatpush1.msra.mxu0 %v360
        %461 = vmatprep.subr.mxu0 0.0
        %462 = vmatpush1.msra.mxu0 %v361
        %463 = vmatprep.subr.mxu0 0.0
        %464 = vmatpush1.msra.mxu0 %v362
        %465 = vmatprep.subr.mxu0 0.0
        %466 = vmatpush1.msra.mxu0 0.0
        %467 = vmatprep.subr.mxu0 0.0
        %468 = vmatpush1.msra.mxu0 0.0
        %469 = vmatprep.subr.mxu0 0.0
        %470 = vmatpush1.msra.mxu0 0.0
        %471 = vmatprep.subr.mxu0 0.0
        %472 = vmatpush1.msra.mxu0 0.0
        %473 = vmatprep.subr.mxu0 0.0
        %474 = vmatpush1.msra.mxu0 0.0
        %475 = vmatprep.subr.mxu0 0.0
        %476 = vmatpush1.msra.mxu0 0.0
        %477 = vmatprep.subr.mxu0 0.0
        %478 = vmatpush1.msra.mxu0 0.0
        %479 = vmatprep.subr.mxu0 0.0
        %480 = vmatpush1.msra.mxu0 0.0
        %481 = vmatprep.subr.mxu0 0.0
        %482 = vmatpush1.msra.mxu0 0.0
        %483 = vmatprep.subr.mxu0 0.0
        %484 = vmatpush1.msra.mxu0 0.0
        %485 = vmatprep.subr.mxu0 0.0
        %486 = vmatpush1.msra.mxu0 0.0
        %487 = vmatprep.subr.mxu0 0.0
        %488 = vmatpush1.msra.mxu0 0.0
        %489 = vmatprep.subr.mxu0 0.0
        %490 = vmatpush1.msra.mxu0 0.0
        %491 = vmatprep.subr.mxu0 0.0
        %492 = vmatpush1.msra.mxu0 0.0
        %493 = vmatprep.subr.mxu0 0.0
        %494 = vmatpush1.msra.mxu0 0.0
        %495 = vmatprep.subr.mxu0 0.0
        %496 = vmatpush1.msra.mxu0 0.0
        %497 = vmatprep.mubr.f32.mxu0 0.0
        %498 = vmatmul.mubr.f32.gmra.mrb[0].mxu0 %v330
        %v499 = vpop.f32.mrb[0].mxu0
        %v500 = vadd.f32 0.0, %v499
        %v501 = vpop.f32.mrb[0].mxu0
        %502 = vdwg.mxu0
        %v503 = vadd.f32 %v327, %v430
        %v504 = vadd.f32 %v328, %v500
        %505 = vst [vmem:[%s294] sm:$0xff] %v503
        %506 = vst [vmem:[%s294 + $0x8] sm:$0xff] %v504
        %s507 = sand.u32 %s149, 1
        %s508 = scalar_lea.sflag [#allocation4], %s507
        %s509 = sand.u32 %s149, 1
        %s510 = smul.addr %s509, 16
        %s511 = scalar_lea.vmem [#allocation7], %s510
        // Predicated region
        $region45: #{tpu_custom_call.1} parent=31 // pred_check
          %p512 = pneg %p159
        $region46: #{tpu_custom_call.1} parent=31 // pred_check_branch
          %514 = sbr.rel (%p512) target = $region48
        $region47: #{tpu_custom_call.1} parent=31 // pred_region
          %s515 = smul.u32 2, %s29
          %s517 = ssub.s32 256, 256
          %518 = vsyncadd %s508, %s517
          %s519 = sadd.s32 %s31, %s30
          %s520 = sadd.s32 %s519, %s515
          %s521 = smul.addr %s520, 128
          %s522 = scalar_lea.hbm %s3, %s521
          %s523 = sshll.u32 %s511, 4
          %s524 = int_to_ptr.vmem [resolvable:$true] %s523
          %529 = dma.vmem_to_hbm [thread:$0]  %s524, 256, %s522, %s508, 128, 128, 8
        $region48: #{tpu_custom_call.1} parent=31 // pred_fallthru
          _
      $region32: #{tpu_custom_call.1} parent=5 // pred_fallthru
        _
      %p530 = scmp.le.s32.totalorder 2, %s18
      // Predicated region
      $region49: #{tpu_custom_call.1} parent=5 // pred_check
        %p531 = pneg %p530
      $region50: #{tpu_custom_call.1} parent=5 // pred_check_branch
        %533 = sbr.rel (%p531) target = $region52
      $region51: #{tpu_custom_call.1} parent=5 // pred_region
        %s534 = ssub.s32 %s18, 2
        // Predicated region
        $region53: #{tpu_custom_call.1} parent=51 // pred_check
          %p535 = pneg %p165
        $region54: #{tpu_custom_call.1} parent=51 // pred_check_branch
          %537 = sbr.rel (%p535) target = $region56
        $region55: #{tpu_custom_call.1} parent=51 // pred_region
          %s538 = sand.u32 %s150, 1
          %s539 = scalar_lea.sflag [#allocation4], %s538
          %s540 = sand.u32 %s150, 1
          %s541 = smul.addr %s540, 16
          %s542 = scalar_lea.vmem [#allocation7], %s541
          %543 = dma.done %s539, 256
        $region56: #{tpu_custom_call.1} parent=51 // pred_fallthru
          _
      $region52: #{tpu_custom_call.1} parent=5 // pred_fallthru
        _
    $region6: #{tpu_custom_call.1} parent=1 // loop_footer
      %s22 = sadd.s32 1, %s18
    $region7: #{tpu_custom_call.1} parent=1 // loop_footer_branch
      %17 = sbr.rel target = $region3
    $region8: #{tpu_custom_call.1} parent=1 // loop_exit
      _
    %544 = vsyncpa [#allocation3], 1
    %s545 = scalar_lea.sflag [#allocation3], 1
    %546 = vsyncpa %s545, 1
    %547 = vsyncpa [#allocation6], 1
    %s548 = scalar_lea.sflag [#allocation6], 1
    %549 = vsyncpa %s548, 1
    %550 = vsyncpa [#allocation4], 1
    %s551 = scalar_lea.sflag [#allocation4], 1
    %552 = vsyncpa %s551, 1

</llo_original>
